<compile_context>
chip_gen: v5e
topology: v5e:2x2
jax: 0.10.0
libtpu: 0.0.40
codegen_flags: <defaults>
</compile_context>

<pallas_src>
import jax
import jax.numpy as jnp
from jax.experimental import pallas as pl
from jax.experimental.pallas import tpu as pltpu


# --------------------------------------------------------------------------
# helpers
# --------------------------------------------------------------------------
def _round_up(x, m):
    return ((x + m - 1) // m) * m


def _pick_seq_tile(n_pad):
    """Largest sublane tile (<=1024) that divides the padded sequence length."""
    for cand in (1024, 512, 256, 128, 64, 32, 16, 8):
        if n_pad % cand == 0:
            return cand
    return n_pad  # unreachable: n_pad is always a multiple of 8


def _pick_chan_tile(c):
    """Lane-dense channel tile (multiple of 128) when possible, else full C."""
    if c % 128 == 0:
        if c % 512 == 0:
            return 512
        if c % 256 == 0:
            return 256
        return 128
    return c  # sub-128 / odd channel counts: single full-width (lane-padded) tile


# --------------------------------------------------------------------------
# kernels
# --------------------------------------------------------------------------
def _max_pool_kernel(x_ref, o_ref):
    # o_ref block (1, 1, tc) is resident across the sequence-reduction axis.
    @pl.when(pl.program_id(2) == 0)
    def _():
        o_ref[...] = jnp.full(o_ref.shape, -jnp.inf, o_ref.dtype)

    tile_max = jnp.max(x_ref[...], axis=1, keepdims=True)  # (1, 1, tc)
    o_ref[...] = jnp.maximum(o_ref[...], tile_max)


def _masked_max_pool_kernel(x_ref, m_ref, o_ref):
    @pl.when(pl.program_id(2) == 0)
    def _():
        o_ref[...] = jnp.full(o_ref.shape, -jnp.inf, o_ref.dtype)

    x = x_ref[...]                              # (1, tn, tc)
    m = m_ref[...].astype(x.dtype)              # (1, tn, 1) -> broadcasts over lanes
    xm = x * m + (1.0 - m) * jnp.asarray(-10000.0, x.dtype)
    tile_max = jnp.max(xm, axis=1, keepdims=True)
    o_ref[...] = jnp.maximum(o_ref[...], tile_max)


# --------------------------------------------------------------------------
# pallas_call wrapper: masked / unmasked global max over the sequence dim
# --------------------------------------------------------------------------
def _pallas_global_max(x, mask=None):
    """x: (B, N, C) float, mask: optional (B, N) -> (B, 1, C)."""
    B, N, C = x.shape
    out_dtype = x.dtype

    tc = _pick_chan_tile(C)
    n_pad = _round_up(max(N, 8), 8)
    tn = _pick_seq_tile(n_pad)

    if mask is not None:
        mask = mask.astype(out_dtype)

    if n_pad != N:
        pad = n_pad - N
        # padded rows contribute -inf to the max (exact, for both variants)
        x = jnp.pad(x, ((0, 0), (0, pad), (0, 0)), constant_values=float("-inf"))
        if mask is not None:
            mask = jnp.pad(mask, ((0, 0), (0, pad)), constant_values=1.0)

    grid = (B, C // tc, n_pad // tn)
    x_spec = pl.BlockSpec((1, tn, tc), lambda b, c, n: (b, n, c))
    out_spec = pl.BlockSpec((1, 1, tc), lambda b, c, n: (b, 0, c))
    out_shape = jax.ShapeDtypeStruct((B, 1, C), out_dtype)
    cparams = pltpu.CompilerParams(
        dimension_semantics=("parallel", "parallel", "arbitrary")
    )

    if mask is None:
        return pl.pallas_call(
            _max_pool_kernel,
            grid=grid,
            in_specs=[x_spec],
            out_specs=out_spec,
            out_shape=out_shape,
            compiler_params=cparams,
        )(x)

    m3 = mask.reshape(B, n_pad, 1)
    m_spec = pl.BlockSpec((1, tn, 1), lambda b, c, n: (b, n, 0))
    return pl.pallas_call(
        _masked_max_pool_kernel,
        grid=grid,
        in_specs=[x_spec, m_spec],
        out_specs=out_spec,
        out_shape=out_shape,
        compiler_params=cparams,
    )(x, m3)


# --------------------------------------------------------------------------
# full forward (mirrors GlobalMaxPoolLayer.forward)
# --------------------------------------------------------------------------
def global_max_pool_forward(x, attention_mask=None, h=0, w=0, *,
                            use_class_token=False, training=True):
    if not training:
        # eval mode: identity pass-through, exactly like the PyTorch module
        return (x, None, (h, w), attention_mask)

    if use_class_token:
        cls_token, body = x[:, :1, :], x[:, 1:, :]
    else:
        cls_token, body = None, x

    pooled = _pallas_global_max(body, attention_mask)

    if use_class_token:
        pooled = jnp.concatenate([cls_token, pooled], axis=1)

    return (pooled, None, (h, w), attention_mask)


# --------------------------------------------------------------------------
# pure-JAX reference for verification
# --------------------------------------------------------------------------
def _reference(x, attention_mask=None, use_class_token=False):
    if use_class_token:
        cls_token, body = x[:, :1, :], x[:, 1:, :]
    else:
        cls_token, body = None, x
    if attention_mask is not None:
        m = attention_mask[..., None].astype(body.dtype)
        body = body * m + (1.0 - m) * (-10000.0)
    pooled = jnp.max(body, axis=1, keepdims=True)
    if use_class_token:
        pooled = jnp.concatenate([cls_token, pooled], axis=1)
    return pooled


# --------------------------------------------------------------------------
if __name__ == "__main__":
    key = jax.random.PRNGKey(0)
    k1, k2, k3 = jax.random.split(key, 3)

    # case 1: plain global max pool, tile-aligned shapes
    B, N, C = 2, 64, 256
    x = jax.random.normal(k1, (B, N, C), dtype=jnp.float32)
    out1, _, hw1, _ = global_max_pool_forward(x, h=4, w=4, training=True)
    out1 = jax.block_until_ready(out1)
    assert out1.shape == (B, 1, C)
    assert hw1 == (4, 4)
    assert jnp.allclose(out1, _reference(x), atol=0.0, rtol=0.0)

    # case 2: with attention mask (0/1 floats)
    mask = (jax.random.uniform(k2, (B, N)) > 0.3).astype(jnp.float32)
    out2, _, _, m_out = global_max_pool_forward(x, attention_mask=mask, training=True)
    out2 = jax.block_until_ready(out2)
    assert jnp.allclose(out2, _reference(x, attention_mask=mask), atol=1e-6, rtol=1e-6)
    assert m_out is mask

    # case 3: class token + ragged sequence length (exercises -inf padding path)
    xc = jax.random.normal(k3, (B, 51, C), dtype=jnp.float32)  # 1 cls + 50 tokens
    out3, _, _, _ = global_max_pool_forward(xc, use_class_token=True, training=True)
    out3 = jax.block_until_ready(out3)
    assert out3.shape == (B, 2, C)
    assert jnp.allclose(out3, _reference(xc, use_class_token=True), atol=0.0, rtol=0.0)

    # case 4: eval mode is an identity pass-through
    out4, _, _, _ = global_max_pool_forward(x, training=False)
    assert out4 is x

    print("KERNEL_OK")
</pallas_src>

<mosaic_0001>
module attributes {stable_mosaic.version = 11 : i64} {
  func.func @_max_pool_kernel(%arg0: i32, %arg1: i32, %arg2: i32, %arg3: memref<1x64x256xf32, #tpu.memory_space<vmem>>, %arg4: memref<1x1x256xf32, #tpu.memory_space<vmem>>) attributes {dimension_semantics = [#tpu.dimension_semantics<parallel>, #tpu.dimension_semantics<parallel>, #tpu.dimension_semantics<arbitrary>], iteration_bounds = array<i64: 2, 1, 1>, scalar_prefetch = 0 : i64, scratch_operands = 0 : i64, tpu.core_type = #tpu.core_type<tc>, window_params = [{transform_indices = @transform_0, window_bounds = array<i64: 1, 64, 256>}, {transform_indices = @transform_1, window_bounds = array<i64: 1, 1, 256>}]} {
    %c0_i32 = arith.constant 0 : i32
    %0 = arith.cmpi eq, %arg2, %c0_i32 : i32
    %1 = arith.extui %0 : i1 to i32
    %c0_i32_0 = arith.constant 0 : i32
    %2 = arith.cmpi ne, %1, %c0_i32_0 : i32
    scf.if %2 {
      %cst_9 = arith.constant 0xFF800000 : f32
      %9 = vector.broadcast %cst_9 : f32 to vector<1x1x256xf32>
      %c0_10 = arith.constant 0 : index
      %c0_11 = arith.constant 0 : index
      %c0_12 = arith.constant 0 : index
      %10 = vector.load %arg4[%c0_10, %c0_11, %c0_12] : memref<1x1x256xf32, #tpu.memory_space<vmem>>, vector<1x1x256xf32>
      tpu.vector_store %arg4[%c0_10, %c0_11, %c0_12], %9 {strides = array<i32>} : memref<1x1x256xf32, #tpu.memory_space<vmem>>, vector<1x1x256xf32>,
    } else {
    }
    %c0 = arith.constant 0 : index
    %c0_1 = arith.constant 0 : index
    %c0_2 = arith.constant 0 : index
    %3 = vector.load %arg3[%c0, %c0_1, %c0_2] : memref<1x64x256xf32, #tpu.memory_space<vmem>>, vector<1x64x256xf32>
    %cst = arith.constant dense<0xFF800000> : vector<1x256xf32>
    %4 = vector.multi_reduction <maximumf>, %3, %cst [1] : vector<1x64x256xf32> to vector<1x256xf32>
    %5 = vector.shape_cast %4 : vector<1x256xf32> to vector<1x1x256xf32>
    %c0_3 = arith.constant 0 : index
    %c0_4 = arith.constant 0 : index
    %c0_5 = arith.constant 0 : index
    %6 = vector.load %arg4[%c0_3, %c0_4, %c0_5] : memref<1x1x256xf32, #tpu.memory_space<vmem>>, vector<1x1x256xf32>
    %7 = arith.maximumf %6, %5 : vector<1x1x256xf32>
    %c0_6 = arith.constant 0 : index
    %c0_7 = arith.constant 0 : index
    %c0_8 = arith.constant 0 : index
    %8 = vector.load %arg4[%c0_6, %c0_7, %c0_8] : memref<1x1x256xf32, #tpu.memory_space<vmem>>, vector<1x1x256xf32>
    tpu.vector_store %arg4[%c0_6, %c0_7, %c0_8], %7 {strides = array<i32>} : memref<1x1x256xf32, #tpu.memory_space<vmem>>, vector<1x1x256xf32>,
    return
  }
  func.func @transform_0(%arg0: i32, %arg1: i32, %arg2: i32) -> (i32, i32, i32) {
    %c0_i32 = arith.constant 0 : i32
    return %arg0, %arg2, %arg1 : i32, i32, i32
  }
  func.func @transform_1(%arg0: i32, %arg1: i32, %arg2: i32) -> (i32, i32, i32) {
    %c0_i32 = arith.constant 0 : i32
    %c0_i32_0 = arith.constant 0 : i32
    return %arg0, %c0_i32, %arg1 : i32, i32, i32
  }
}

</mosaic_0001>

<llo_original>
// kernel: tpu_custom_call.1
$region0: #{tpu_custom_call.1}
  #allocation0 [shape = 'u32[]', space=smem, size = 0x4, offset = 0x4, fixed_abs, tag = 'smem constant byte address 0x4 - core index']
  #allocation1 [shape = 'u32[72,128]{1,0:T(1,128)}', space=vmem, size = 0x9000, scoped, tag = 'internal scratch']
  %s0 = inlined_call_operand.hbm [shape: f32[2,64,256], index: 0, kind: input, shape index: {}]
  %s1 = inlined_call_operand.hbm [shape: f32[2,1,256], index: 1, kind: output, shape index: {}]
  %s2 = sld [smem:[#allocation0]]
  $region45: #{tpu_custom_call.1} parent=0
    _
  %s4 = ssub.s32 1, %s2
  %s5 = scalar_select 0, %s4, %s2
  $region1: #{tpu_custom_call.1} parent=0
    #allocation2 [shape = 'u8[131072]{0}', space=vmem, size = 0x20000, scoped, tag = 'input window, operand 0']
    #allocation3 [shape = 's32[2]{0}', space=sflag, size = 0x8, scoped, tag = 'scoped memory for tpu_custom_call.1']
    #allocation4 [shape = 's32[2]{0}', space=sflag, size = 0x8, scoped, tag = 'scoped memory for tpu_custom_call.1']
    #allocation5 [shape = 'u8[2048]{0}', space=vmem, size = 0x800, scoped, tag = 'output window, operand 0']
    %6 = vsyncpa [#allocation3], 0
    %s7 = scalar_lea.sflag [#allocation3], 1
    %8 = vsyncpa %s7, 0
    %9 = vsyncpa [#allocation4], 0
    %s10 = scalar_lea.sflag [#allocation4], 1
    %11 = vsyncpa %s10, 0
    loop: start=0, step=1, limit=4
    $region2: #{tpu_custom_call.1} parent=1 // loop_pre_header
      _
    $region3: #{tpu_custom_call.1} parent=1 // loop_header
      %s13 = sphi 0, %s17
      %p14 = scmp.ge.s32.totalorder %s13, 4
      %s20 = sphi 0, %s39
      %s21 = sphi 0, %s35
      %s22 = sphi 0, %s31
      %s23 = sphi 0, %s20
      %s24 = sphi 0, %s21
      %s25 = sphi 0, %s22
      %s26 = sphi 0, %s23
      %s27 = sphi 0, %s24
      %s28 = sphi 0, %s25
      %s46 = sphi 0, %s48
      %s49 = sphi 0, %s46
      %s50 = sphi 0, %s49
      %s66 = sphi 0, %s50
      %s74 = sphi 0, %s76
      %s77 = sphi 0, %s74
      %s78 = sphi 0, %s77
      %s94 = sphi 0, %s78
    $region4: #{tpu_custom_call.1} parent=1 // loop_header_branch
      %16 = sbr.rel (%p14) target = $region8
    $region5: #{tpu_custom_call.1} parent=1 // loop_body
      %s18 = ssub.s32 %s13, 1
      %s19 = ssub.s32 %s13, 2
      %s29 = sadd.s32 1, %s22
      %p30 = scmp.ge.s32.totalorder %s29, 1
      %s31 = scalar_select %p30, 0, %s29
      %s32 = sadd.s32 1, %s21
      %s33 = scalar_select %p30, %s32, %s21
      %p34 = scmp.ge.s32.totalorder %s33, 1
      %s35 = scalar_select %p34, 0, %s33
      %s36 = sadd.s32 1, %s20
      %s37 = scalar_select %p34, %s36, %s20
      %p38 = scmp.ge.s32.totalorder %s37, 2
      %s39 = scalar_select %p38, 0, %s37
      %s40 = ssub.s32 %s20, %s39
      %s41 = ssub.s32 %s22, %s31
      %s42 = sor.u32 %s40, %s41
      %s43 = ssub.s32 %s21, %s35
      %s44 = sor.u32 %s42, %s43
      %p45 = scmp.eq.s32.totalorder %s44, 0
      %s47 = sadd.s32 %s46, 1
      %s48 = scalar_select %p45, %s46, %s47
      %p51 = pneg %p45
      %p52 = scmp.eq.s32.totalorder %s13, 1
      %p53 = por %p51, %p52
      %p54 = scmp.ne.s32.totalorder %s46, %s49
      %p55 = scmp.eq.s32.totalorder %s13, 0
      %p56 = por %p54, %p55
      %p57 = scmp.ne.s32.totalorder %s46, %s49
      %p58 = scmp.eq.s32.totalorder %s18, 1
      %p59 = por %p57, %p58
      %p60 = scmp.ne.s32.totalorder %s49, %s50
      %p61 = scmp.eq.s32.totalorder %s18, 0
      %p62 = por %p60, %p61
      %p63 = scmp.ne.s32.totalorder %s49, %s50
      %p64 = scmp.eq.s32.totalorder %s19, 1
      %p65 = por %p63, %p64
      %p67 = scmp.ne.s32.totalorder %s50, %s66
      %p68 = scmp.eq.s32.totalorder %s19, 0
      %p69 = por %p67, %p68
      %s70 = ssub.s32 %s20, %s39
      %s71 = ssub.s32 %s21, %s35
      %s72 = sor.u32 %s70, %s71
      %p73 = scmp.eq.s32.totalorder %s72, 0
      %s75 = sadd.s32 %s74, 1
      %s76 = scalar_select %p73, %s74, %s75
      %p79 = pneg %p73
      %p80 = scmp.eq.s32.totalorder %s13, 1
      %p81 = por %p79, %p80
      %p82 = scmp.ne.s32.totalorder %s74, %s77
      %p83 = scmp.eq.s32.totalorder %s13, 0
      %p84 = por %p82, %p83
      %p85 = scmp.ne.s32.totalorder %s74, %s77
      %p86 = scmp.eq.s32.totalorder %s18, 1
      %p87 = por %p85, %p86
      %p88 = scmp.ne.s32.totalorder %s77, %s78
      %p89 = scmp.eq.s32.totalorder %s18, 0
      %p90 = por %p88, %p89
      %p91 = scmp.ne.s32.totalorder %s77, %s78
      %p92 = scmp.eq.s32.totalorder %s19, 1
      %p93 = por %p91, %p92
      %p95 = scmp.ne.s32.totalorder %s78, %s94
      %p96 = scmp.eq.s32.totalorder %s19, 0
      %p97 = por %p95, %p96
      %p98 = scmp.le.s32.totalorder 1, %s13
      %p99 = scmp.lt.s32.totalorder %s13, 3
      %p100 = pnand %p98, %p99
      %p101 = pneg %p100
      // Predicated region
      $region9: #{tpu_custom_call.1} parent=5 // pred_check
        _
      $region10: #{tpu_custom_call.1} parent=5 // pred_check_branch
        %103 = sbr.rel (%p100) target = $region12
      $region11: #{tpu_custom_call.1} parent=5 // pred_region
        %s104 = ssub.s32 %s13, 1
      $region12: #{tpu_custom_call.1} parent=5 // pred_fallthru
        _
      %p105 = scmp.lt.s32.totalorder %s13, 2
      // Predicated region
      $region13: #{tpu_custom_call.1} parent=5 // pred_check
        %p106 = pneg %p105
      $region14: #{tpu_custom_call.1} parent=5 // pred_check_branch
        %108 = sbr.rel (%p106) target = $region16
      $region15: #{tpu_custom_call.1} parent=5 // pred_region
        // Predicated region
        $region17: #{tpu_custom_call.1} parent=15 // pred_check
          %p109 = pneg %p56
        $region18: #{tpu_custom_call.1} parent=15 // pred_check_branch
          %111 = sbr.rel (%p109) target = $region20
        $region19: #{tpu_custom_call.1} parent=15 // pred_region
          %s112 = sand.u32 %s46, 1
          %s113 = scalar_lea.sflag [#allocation3], %s112
          %s114 = sand.u32 %s46, 1
          %s115 = smul.addr %s114, 128
          %s116 = scalar_lea.vmem [#allocation2], %s115
          %s117 = smul.u32 8, %s22
          %s118 = smul.u32 2, %s21
          %120 = vsyncadd %s113, 0
          %s121 = smul.addr %s117, 2
          %s122 = sadd.s32 %s118, %s121
          %s123 = smul.addr %s20, 16
          %s124 = sadd.s32 %s122, %s123
          %s125 = smul.addr %s124, 8
          %s126 = scalar_lea.hbm %s0, %s125
          %s127 = sshll.u32 %s126, 4
          %s128 = int_to_ptr.hbm [resolvable:$true] %s127
          %s129 = sshll.u32 %s116, 4
          %s130 = int_to_ptr.vmem [resolvable:$true] %s129
          %135 = dma.hbm_to_vmem [thread:$0]  %s128, 2048, %s130, %s113, 256, 256, 16
        $region20: #{tpu_custom_call.1} parent=15 // pred_fallthru
          _
      $region16: #{tpu_custom_call.1} parent=5 // pred_fallthru
        _
      %p136 = scmp.le.s32.totalorder 1, %s13
      %p137 = scmp.lt.s32.totalorder %s13, 3
      %p138 = pnand %p136, %p137
      %p139 = pneg %p138
      // Predicated region
      $region21: #{tpu_custom_call.1} parent=5 // pred_check
        _
      $region22: #{tpu_custom_call.1} parent=5 // pred_check_branch
        %141 = sbr.rel (%p138) target = $region24
      $region23: #{tpu_custom_call.1} parent=5 // pred_region
        %s142 = ssub.s32 %s13, 1
        %s143 = sand.u32 %s49, 1
        %s144 = scalar_lea.sflag [#allocation3], %s143
        %s145 = sand.u32 %s49, 1
        %s146 = smul.addr %s145, 128
        %s147 = scalar_lea.vmem [#allocation2], %s146
        // Predicated region
        $region25: #{tpu_custom_call.1} parent=23 // pred_check
          %p148 = pneg %p62
        $region26: #{tpu_custom_call.1} parent=23 // pred_check_branch
          %150 = sbr.rel (%p148) target = $region28
        $region27: #{tpu_custom_call.1} parent=23 // pred_region
          %152 = dma.done %s144, 2048
        $region28: #{tpu_custom_call.1} parent=23 // pred_fallthru
          _
        %s153 = sand.u32 %s49, 1
        %s154 = scalar_lea.sflag [#allocation3], %s153
        %s155 = sand.u32 %s49, 1
        %s156 = smul.addr %s155, 128
        %s157 = scalar_lea.vmem [#allocation2], %s156
        %p158 = pneg %p62
        %p159 = pneg %p59
        %p160 = pneg %p90
        %p161 = pneg %p87
        %s162 = sand.u32 %s77, 1
        %s163 = scalar_lea.sflag [#allocation4], %s162
        %s164 = sand.u32 %s77, 1
        %s165 = smul.addr %s164, 2
        %s166 = scalar_lea.vmem [#allocation5], %s165
        %s167 = smul.u32 8, %s25
        %s168 = smul.u32 2, %s24
        %s169 = smul.u32 2, %s24
        %p170 = scmp.eq.s32.totalorder %s25, 0
        // Predicated region
        $region29: #{tpu_custom_call.1} parent=23 // pred_check
          %p171 = pneg %p170
        $region30: #{tpu_custom_call.1} parent=23 // pred_check_branch
          %173 = sbr.rel (%p171) target = $region32
        $region31: #{tpu_custom_call.1} parent=23 // pred_region
          %v174 = vlaneseq
          %vm175 = vcmp.ge.s32.totalorder %v174, 0
          %vm176 = vcmp.lt.s32.totalorder %v174, 256
          %vm177 = vmand %vm175, %vm176
          %178 = vst.msk [vmem:[%s166] sm:$0x3] %vm177, -inf
        $region32: #{tpu_custom_call.1} parent=23 // pred_fallthru
          _
        %v179 = vld [vmem:[%s147] sm:$0xff]
        %v180 = vld [vmem:[%s147 + $0x8] sm:$0xff]
        %v181 = vld [vmem:[%s147 + $0x10] sm:$0xff]
        %v182 = vld [vmem:[%s147 + $0x18] sm:$0xff]
        %v183 = vld [vmem:[%s147 + $0x20] sm:$0xff]
        %v184 = vld [vmem:[%s147 + $0x28] sm:$0xff]
        %v185 = vld [vmem:[%s147 + $0x30] sm:$0xff]
        %v186 = vld [vmem:[%s147 + $0x38] sm:$0xff]
        %v187 = vld [vmem:[%s147 + $0x40] sm:$0xff]
        %v188 = vld [vmem:[%s147 + $0x48] sm:$0xff]
        %v189 = vld [vmem:[%s147 + $0x50] sm:$0xff]
        %v190 = vld [vmem:[%s147 + $0x58] sm:$0xff]
        %v191 = vld [vmem:[%s147 + $0x60] sm:$0xff]
        %v192 = vld [vmem:[%s147 + $0x68] sm:$0xff]
        %v193 = vld [vmem:[%s147 + $0x70] sm:$0xff]
        %v194 = vld [vmem:[%s147 + $0x78] sm:$0xff]
        %v195 = vmax.f32 %v179, %v183
        %v196 = vmax.f32 %v181, %v185
        %v197 = vmax.f32 %v195, %v187
        %v198 = vmax.f32 %v196, %v189
        %v199 = vmax.f32 %v197, %v191
        %v200 = vmax.f32 %v198, %v193
        %v201 = vmax.f32 %v199, %v200
        %v202 = vrot.slane %v201, 4
        %v203 = vmax.f32 %v201, %v202
        %v204 = vrot.slane %v203, 2
        %v205 = vmax.f32 %v203, %v204
        %v206 = vrot.slane %v205, 1
        %v207 = vmax.f32 %v205, %v206
        %v208 = vmax.f32 %v180, %v184
        %v209 = vmax.f32 %v182, %v186
        %v210 = vmax.f32 %v208, %v188
        %v211 = vmax.f32 %v209, %v190
        %v212 = vmax.f32 %v210, %v192
        %v213 = vmax.f32 %v211, %v194
        %v214 = vmax.f32 %v212, %v213
        %v215 = vrot.slane %v214, 4
        %v216 = vmax.f32 %v214, %v215
        %v217 = vrot.slane %v216, 2
        %v218 = vmax.f32 %v216, %v217
        %v219 = vrot.slane %v218, 1
        %v220 = vmax.f32 %v218, %v219
        %v221 = vld [vmem:[%s166] sm:$0x3]
        %v224 = vrot.slane %v220, 7
        %vm225 = vcmask 1040384
        %v226 = vsel %vm225, %v207, %v224
        %v228 = vmax.f32 %v221, %v226
        %v229 = vlaneseq
        %vm230 = vcmp.ge.s32.totalorder %v229, 0
        %vm231 = vcmp.lt.s32.totalorder %v229, 256
        %vm232 = vmand %vm230, %vm231
        %233 = vst.msk [vmem:[%s166] sm:$0x3] %vm232, %v228
        %s234 = sand.u32 %s77, 1
        %s235 = scalar_lea.sflag [#allocation4], %s234
        %s236 = sand.u32 %s77, 1
        %s237 = smul.addr %s236, 2
        %s238 = scalar_lea.vmem [#allocation5], %s237
        // Predicated region
        $region33: #{tpu_custom_call.1} parent=23 // pred_check
          %p239 = pneg %p87
        $region34: #{tpu_custom_call.1} parent=23 // pred_check_branch
          %241 = sbr.rel (%p239) target = $region36
        $region35: #{tpu_custom_call.1} parent=23 // pred_region
          %s242 = smul.u32 2, %s24
          %244 = vsyncadd %s235, 0
          %s245 = smul.addr %s23, 2
          %s246 = sadd.s32 %s242, %s245
          %s247 = scalar_lea.hbm %s1, %s246
          %s249 = sshll.u32 %s238, 4
          %s250 = int_to_ptr.vmem [resolvable:$true] %s249
          %s251 = sshll.u32 %s247, 4
          %s252 = int_to_ptr.hbm [resolvable:$true] %s251
          %254 = dma.vmem_to_hbm [thread:$0]  %s250, 32, %s252, %s235
        $region36: #{tpu_custom_call.1} parent=23 // pred_fallthru
          _
      $region24: #{tpu_custom_call.1} parent=5 // pred_fallthru
        _
      %p255 = scmp.le.s32.totalorder 2, %s13
      // Predicated region
      $region37: #{tpu_custom_call.1} parent=5 // pred_check
        %p256 = pneg %p255
      $region38: #{tpu_custom_call.1} parent=5 // pred_check_branch
        %258 = sbr.rel (%p256) target = $region40
      $region39: #{tpu_custom_call.1} parent=5 // pred_region
        %s259 = ssub.s32 %s13, 2
        // Predicated region
        $region41: #{tpu_custom_call.1} parent=39 // pred_check
          %p260 = pneg %p93
        $region42: #{tpu_custom_call.1} parent=39 // pred_check_branch
          %262 = sbr.rel (%p260) target = $region44
        $region43: #{tpu_custom_call.1} parent=39 // pred_region
          %s263 = sand.u32 %s78, 1
          %s264 = scalar_lea.sflag [#allocation4], %s263
          %s265 = sand.u32 %s78, 1
          %s266 = smul.addr %s265, 2
          %s267 = scalar_lea.vmem [#allocation5], %s266
          %269 = dma.done %s264, 32
        $region44: #{tpu_custom_call.1} parent=39 // pred_fallthru
          _
      $region40: #{tpu_custom_call.1} parent=5 // pred_fallthru
        _
    $region6: #{tpu_custom_call.1} parent=1 // loop_footer
      %s17 = sadd.s32 1, %s13
    $region7: #{tpu_custom_call.1} parent=1 // loop_footer_branch
      %12 = sbr.rel target = $region3
    $region8: #{tpu_custom_call.1} parent=1 // loop_exit
      _
    %270 = vsyncpa [#allocation3], 1
    %s271 = scalar_lea.sflag [#allocation3], 1
    %272 = vsyncpa %s271, 1
    %273 = vsyncpa [#allocation4], 1
    %s274 = scalar_lea.sflag [#allocation4], 1
    %275 = vsyncpa %s274, 1

</llo_original>
